<compile_context>
chip_gen: v7x
topology: tpu7x:2x2x1
jax: 0.10.0
libtpu: 0.0.40
codegen_flags: <defaults>
</compile_context>

<pallas_src>
import functools

import numpy as np
import jax
import jax.numpy as jnp
from jax.experimental import pallas as pl
from jax.experimental.pallas import tpu as pltpu

_LANES = 128          # lane width of a vreg
_TARGET_ROWS = 1024   # ~128K batch elements (~2.5 MiB HBM traffic) per grid step


def _cdiv(a, b):
    return -(-a // b)


def _round_up(n, m):
    return ((n + m - 1) // m) * m


def _make_kernel(l1, l2, tgt_x, tgt_y, nqxx, nqxy, nqyy, nru):
    """Kernel with all scalar constants baked in as Python floats.

    nq?? / nru already include the 0.5 * (1/(2(l1+l2)))^2 scaling, the
    Q-symmetrisation (Q01+Q10) and the minus sign of -cost, so the body is
    pure dense VPU/EUP math followed by one exp.
    """

    def kernel(xu_ref, out_ref):
        # xu_ref block: (4, TBr, 128) -- rows [cart, theta1, theta2, u]
        cart = xu_ref[0]                     # (TBr, 128)
        uu = xu_ref[3]                       # (TBr, 128)
        s = jnp.sin(xu_ref[1:3])             # (2, TBr, 128) one EUP slab
        c = jnp.cos(xu_ref[1:3])             # (2, TBr, 128) one EUP slab

        tip_x = cart - l1 * s[0] - l2 * s[1]
        tip_y = l1 * c[0] + l2 * c[1]
        dx = tip_x - tgt_x
        dy = tip_y - tgt_y

        neg_cost = (nqxx * dx * dx + nqxy * dx * dy + nqyy * dy * dy
                    + nru * uu * uu)
        out_ref[...] = jnp.exp(neg_cost)

    return kernel


@functools.partial(jax.jit, static_argnames=(
    "pole1_length", "pole2_length", "target", "Q", "R"))
def _cart_acrobot_reward_impl(x, u, pole1_length, pole2_length, target, Q, R):
    # Constants are static (module parameters) -> fold everything on the host.
    l1 = float(pole1_length)
    l2 = float(pole2_length)
    target = np.asarray(target, np.float64).reshape(-1)
    Q = np.asarray(Q, np.float64).reshape(2, 2)
    R = np.asarray(R, np.float64).reshape(1, 1)

    inv_scale = 1.0 / (2.0 * (l1 + l2))
    tgt_x = float(target[0] - l1 * np.sin(target[2]) - l2 * np.sin(target[4]))
    tgt_y = float(l1 * np.cos(target[2]) + l2 * np.cos(target[4]))
    s2 = 0.5 * inv_scale * inv_scale
    nqxx = float(-s2 * Q[0, 0])
    nqxy = float(-s2 * (Q[0, 1] + Q[1, 0]))
    nqyy = float(-s2 * Q[1, 1])
    nru = float(-0.5 * R[0, 0])

    B = x.shape[0]
    rows = _cdiv(max(B, 1), _LANES)

    # Tile selection: big tiles, minimal padding, even tile count for v7x.
    n_tiles = max(1, _cdiv(rows, _TARGET_ROWS))
    if n_tiles == 1 and rows >= 128:       # enough work -> let both v7x TCs run
        n_tiles = 2
    if n_tiles > 1 and (n_tiles % 2):
        n_tiles += 1
    tbr = _round_up(_cdiv(rows, n_tiles), 8)   # sublane-aligned tile rows
    rows_pad = tbr * n_tiles
    n_pad = rows_pad * _LANES

    # One fused gather/transpose/pad/reshape -> feature-major dense slab.
    slab = jnp.concatenate(
        [x[:, 0][None, :], x[:, 2][None, :], x[:, 4][None, :], u[:, 0][None, :]],
        axis=0)                                          # (4, B)
    slab = jnp.pad(slab, ((0, 0), (0, n_pad - B)))       # (4, n_pad)
    slab = slab.reshape(4, rows_pad, _LANES)             # (4, rows_pad, 128)

    kernel = _make_kernel(l1, l2, tgt_x, tgt_y, nqxx, nqxy, nqyy, nru)

    out = pl.pallas_call(
        kernel,
        out_shape=jax.ShapeDtypeStruct((rows_pad, _LANES), jnp.float32),
        grid=(n_tiles,),
        in_specs=[pl.BlockSpec((4, tbr, _LANES), lambda i: (0, i, 0))],
        out_specs=pl.BlockSpec((tbr, _LANES), lambda i: (i, 0)),
        compiler_params=pltpu.CompilerParams(
            dimension_semantics=("parallel",)),
    )(slab)

    # (rows_pad, 128) -> (B, 1); padded lanes (reward 1.0 on zero state) are
    # dropped here and never leak into the result.
    return out.reshape(-1)[:B][:, None]


def cart_acrobot_reward(x, u, *, pole1_length=0.6, pole2_length=0.6,
                        target=None, Q=None, R=None):
    """Pallas TPU implementation of CartAcrobotReward.forward.

    x: (B, 6) state (angles at dims 2 and 4);  u: (B, 1) control.
    Returns reward of shape (B, 1), float32.

    target/Q/R are treated as static module parameters (host values).
    """
    if target is None:
        target = np.zeros((6,), np.float32)
    if Q is None:
        Q = 8.0 * np.eye(2)
    if R is None:
        R = 1e-4 * np.eye(1)

    x = jnp.asarray(x, jnp.float32)
    u = jnp.asarray(u, jnp.float32)
    if x.ndim == 1:
        x = x[None, :]
    if u.ndim == 1:
        u = u[None, :]

    assert x.shape[1] == 6, "state must be 6-dimensional"
    assert u.shape[1] == 1, "control must be (B, 1)"
    # TODO(synk): general (U > 1) control / non-diagonal-size R would need an
    # extra row per control dim in the slab and a small in-kernel loop.

    # Hash the static constants so jit caching works with numpy inputs.
    tgt = tuple(float(v) for v in np.asarray(target, np.float64).reshape(-1))
    q = tuple(float(v) for v in np.asarray(Q, np.float64).reshape(-1))
    r = tuple(float(v) for v in np.asarray(R, np.float64).reshape(-1))
    return _cart_acrobot_reward_impl(
        x, u, float(pole1_length), float(pole2_length), tgt, q, r)


def _reference(x, u, l1=0.6, l2=0.6):
    x = np.asarray(x, np.float32)
    u = np.asarray(u, np.float32)
    tip_x = x[:, 0:1] - l1 * np.sin(x[:, 2:3]) - l2 * np.sin(x[:, 4:5])
    tip_y = l1 * np.cos(x[:, 2:3]) + l2 * np.cos(x[:, 4:5])
    tgt_x, tgt_y = 0.0, l1 + l2              # target state is all zeros
    dx = (tip_x - tgt_x) / (2.0 * (l1 + l2))
    dy = (tip_y - tgt_y) / (2.0 * (l1 + l2))
    cost = 0.5 * (8.0 * (dx * dx + dy * dy) + 1e-4 * u * u)
    return np.exp(-cost)


if __name__ == "__main__":
    key = jax.random.PRNGKey(0)
    kx, ku = jax.random.split(key)
    B = 8                                                    # small batch
    x = jax.random.normal(kx, (B, 6), dtype=jnp.float32)     # angles at dims 2, 4
    u = jax.random.normal(ku, (B, 1), dtype=jnp.float32)     # single control input

    reward = cart_acrobot_reward(x, u)
    reward = jax.block_until_ready(reward)

    expected = _reference(x, u)
    assert reward.shape == (B, 1) and reward.dtype == jnp.float32
    np.testing.assert_allclose(np.asarray(reward), expected, rtol=1e-4, atol=1e-4)
    print("KERNEL_OK")
</pallas_src>

<mosaic_0001>
module attributes {stable_mosaic.version = 11 : i64} {
  func.func @kernel(%arg0: i32, %arg1: memref<4x8x128xf32, #tpu.memory_space<vmem>>, %arg2: memref<8x128xf32, #tpu.memory_space<vmem>>) attributes {dimension_semantics = [#tpu.dimension_semantics<parallel>], iteration_bounds = array<i64: 1>, scalar_prefetch = 0 : i64, scratch_operands = 0 : i64, tpu.core_type = #tpu.core_type<tc>, window_params = [{transform_indices = @transform_0, window_bounds = array<i64: 4, 8, 128>}, {transform_indices = @transform_1, window_bounds = array<i64: 8, 128>}]} {
    %c0 = arith.constant 0 : index
    %c0_0 = arith.constant 0 : index
    %c0_1 = arith.constant 0 : index
    %0 = vector.load %arg1[%c0, %c0_0, %c0_1] : memref<4x8x128xf32, #tpu.memory_space<vmem>>, vector<1x8x128xf32>
    %1 = vector.shape_cast %0 : vector<1x8x128xf32> to vector<8x128xf32>
    %c3 = arith.constant 3 : index
    %c0_2 = arith.constant 0 : index
    %c0_3 = arith.constant 0 : index
    %2 = vector.load %arg1[%c3, %c0_2, %c0_3] : memref<4x8x128xf32, #tpu.memory_space<vmem>>, vector<1x8x128xf32>
    %3 = vector.shape_cast %2 : vector<1x8x128xf32> to vector<8x128xf32>
    %c1 = arith.constant 1 : index
    %c0_4 = arith.constant 0 : index
    %c0_5 = arith.constant 0 : index
    %4 = vector.load %arg1[%c1, %c0_4, %c0_5] : memref<4x8x128xf32, #tpu.memory_space<vmem>>, vector<2x8x128xf32>
    %5 = math.sin %4 : vector<2x8x128xf32>
    %c1_6 = arith.constant 1 : index
    %c0_7 = arith.constant 0 : index
    %c0_8 = arith.constant 0 : index
    %6 = vector.load %arg1[%c1_6, %c0_7, %c0_8] : memref<4x8x128xf32, #tpu.memory_space<vmem>>, vector<2x8x128xf32>
    %7 = math.cos %6 : vector<2x8x128xf32>
    %8 = vector.extract_strided_slice %5 {offsets = [0, 0, 0], sizes = [1, 8, 128], strides = [1, 1, 1]} : vector<2x8x128xf32> to vector<1x8x128xf32>
    %9 = vector.shape_cast %8 : vector<1x8x128xf32> to vector<8x128xf32>
    %cst = arith.constant 6.000000e-01 : f32
    %10 = vector.broadcast %cst : f32 to vector<8x128xf32>
    %11 = arith.mulf %10, %9 : vector<8x128xf32>
    %12 = arith.subf %1, %11 : vector<8x128xf32>
    %13 = vector.extract_strided_slice %5 {offsets = [1, 0, 0], sizes = [1, 8, 128], strides = [1, 1, 1]} : vector<2x8x128xf32> to vector<1x8x128xf32>
    %14 = vector.shape_cast %13 : vector<1x8x128xf32> to vector<8x128xf32>
    %cst_9 = arith.constant 6.000000e-01 : f32
    %15 = vector.broadcast %cst_9 : f32 to vector<8x128xf32>
    %16 = arith.mulf %15, %14 : vector<8x128xf32>
    %17 = arith.subf %12, %16 : vector<8x128xf32>
    %18 = vector.extract_strided_slice %7 {offsets = [0, 0, 0], sizes = [1, 8, 128], strides = [1, 1, 1]} : vector<2x8x128xf32> to vector<1x8x128xf32>
    %19 = vector.shape_cast %18 : vector<1x8x128xf32> to vector<8x128xf32>
    %cst_10 = arith.constant 6.000000e-01 : f32
    %20 = vector.broadcast %cst_10 : f32 to vector<8x128xf32>
    %21 = arith.mulf %20, %19 : vector<8x128xf32>
    %22 = vector.extract_strided_slice %7 {offsets = [1, 0, 0], sizes = [1, 8, 128], strides = [1, 1, 1]} : vector<2x8x128xf32> to vector<1x8x128xf32>
    %23 = vector.shape_cast %22 : vector<1x8x128xf32> to vector<8x128xf32>
    %cst_11 = arith.constant 6.000000e-01 : f32
    %24 = vector.broadcast %cst_11 : f32 to vector<8x128xf32>
    %25 = arith.mulf %24, %23 : vector<8x128xf32>
    %26 = arith.addf %21, %25 : vector<8x128xf32>
    %cst_12 = arith.constant 0.000000e+00 : f32
    %27 = vector.broadcast %cst_12 : f32 to vector<8x128xf32>
    %28 = arith.subf %17, %27 : vector<8x128xf32>
    %cst_13 = arith.constant 1.200000e+00 : f32
    %29 = vector.broadcast %cst_13 : f32 to vector<8x128xf32>
    %30 = arith.subf %26, %29 : vector<8x128xf32>
    %cst_14 = arith.constant -0.694444418 : f32
    %31 = vector.broadcast %cst_14 : f32 to vector<8x128xf32>
    %32 = arith.mulf %31, %28 : vector<8x128xf32>
    %33 = arith.mulf %32, %28 : vector<8x128xf32>
    %cst_15 = arith.constant -0.000000e+00 : f32
    %34 = vector.broadcast %cst_15 : f32 to vector<8x128xf32>
    %35 = arith.mulf %34, %28 : vector<8x128xf32>
    %36 = arith.mulf %35, %30 : vector<8x128xf32>
    %37 = arith.addf %33, %36 : vector<8x128xf32>
    %cst_16 = arith.constant -0.694444418 : f32
    %38 = vector.broadcast %cst_16 : f32 to vector<8x128xf32>
    %39 = arith.mulf %38, %30 : vector<8x128xf32>
    %40 = arith.mulf %39, %30 : vector<8x128xf32>
    %41 = arith.addf %37, %40 : vector<8x128xf32>
    %cst_17 = arith.constant -5.000000e-05 : f32
    %42 = vector.broadcast %cst_17 : f32 to vector<8x128xf32>
    %43 = arith.mulf %42, %3 : vector<8x128xf32>
    %44 = arith.mulf %43, %3 : vector<8x128xf32>
    %45 = arith.addf %41, %44 : vector<8x128xf32>
    %46 = math.exp %45 : vector<8x128xf32>
    %c0_18 = arith.constant 0 : index
    %c0_19 = arith.constant 0 : index
    %47 = vector.load %arg2[%c0_18, %c0_19] : memref<8x128xf32, #tpu.memory_space<vmem>>, vector<8x128xf32>
    tpu.vector_store %arg2[%c0_18, %c0_19], %46 {strides = array<i32>} : memref<8x128xf32, #tpu.memory_space<vmem>>, vector<8x128xf32>,
    return
  }
  func.func @transform_0(%arg0: i32) -> (i32, i32, i32) {
    %c0_i32 = arith.constant 0 : i32
    %c0_i32_0 = arith.constant 0 : i32
    %c0_i32_1 = arith.constant 0 : i32
    return %c0_i32, %arg0, %c0_i32_0 : i32, i32, i32
  }
  func.func @transform_1(%arg0: i32) -> (i32, i32) {
    %c0_i32 = arith.constant 0 : i32
    %c0_i32_0 = arith.constant 0 : i32
    return %arg0, %c0_i32 : i32, i32
  }
}

</mosaic_0001>

<llo_original>
// kernel: _cart_acrobot_reward_impl.1
$region0: #{_cart_acrobot_reward_impl.1}
  #allocation0 [shape = 'u32[]', space=smem, size = 0x4, offset = 0x4, fixed_abs, tag = 'smem constant byte address 0x4 - core index']
  #allocation1 [shape = 'u32[144,128]{1,0:T(1,128)}', space=vmem, size = 0x12000, scoped, tag = 'internal scratch']
  %s0 = inlined_call_operand.vmem [shape: f32[4,8,128], index: 0, kind: input, shape index: {}]
  %s1 = inlined_call_operand.vmem [shape: f32[8,128], index: 1, kind: output, shape index: {}]
  %s2 = sld [smem:[#allocation0]]
  $region14: #{_cart_acrobot_reward_impl.1} parent=0
    _
  %s4 = ssub.s32 1, %s2
  %s5 = scalar_select 0, %s4, %s2
  // Predicated region
  $region2: #{_cart_acrobot_reward_impl.1} parent=0 // pred_check
    _
  $region3: #{_cart_acrobot_reward_impl.1} parent=0 // pred_check_branch
    %7 = sbr.rel (0) target = $region5
  $region4: #{_cart_acrobot_reward_impl.1} parent=0 // pred_region
    _
  $region5: #{_cart_acrobot_reward_impl.1} parent=0 // pred_fallthru
    _
  %v8 = vld [vmem:[%s0] sm:$0xff]
  %s9 = scalar_lea.vmem %s0, 24
  %v10 = vld [vmem:[%s9] sm:$0xff]
  %s11 = scalar_lea.vmem %s0, 8
  %v12 = vld [vmem:[%s11] sm:$0xff]
  %v13 = vld [vmem:[%s11 + $0x8] sm:$0xff]
  %v14 = vand.u32 2147483647, %v12
  %vm15 = vcmp.le.f32.partialorder %v14, 0.7853982
  %vm16 = vcmp.lt.s32.totalorder %v12, 0
  %v17 = vand.u32 %v12, 2139095040
  %v18 = vshrl.u32 %v17, 23
  %v19 = vsub.s32 %v18, 127
  %v20 = vand.u32 2147483647, %v12
  %v21 = vand.u32 %v20, 8388607
  %v22 = vor.u32 %v21, 8388608
  %v23 = vsub.s32 0, %v22
  %v24 = vadd.s32 %v19, 1
  %vm25 = vcmp.gt.s32.totalorder %v24, 0
  %v26 = vsel %vm25, %v24, 0
  %v27 = vshrl.u32 %v26, 5
  %v28 = vand.u32 %v26, 31
  %v29 = vsub.s32 32, %v28
  %v30 = vshrl.u32 683565275, %v29
  %v31 = vshll.u32 683565275, %v28
  %v32 = vshrl.u32 2475754826, %v29
  %v33 = vor.u32 %v31, %v32
  %v34 = vshll.u32 2475754826, %v28
  %v35 = vshrl.u32 2131351028, %v29
  %v36 = vor.u32 %v34, %v35
  %v37 = vshll.u32 2131351028, %v28
  %v38 = vshrl.u32 2102212464, %v29
  %v39 = vor.u32 %v37, %v38
  %v40 = vshll.u32 2102212464, %v28
  %v41 = vshrl.u32 920167782, %v29
  %v42 = vor.u32 %v40, %v41
  %v43 = vshll.u32 920167782, %v28
  %v44 = vshrl.u32 1326507024, %v29
  %v45 = vor.u32 %v43, %v44
  %vm46 = vcmp.lt.s32.totalorder %v27, 1
  %vm47 = vcmp.lt.s32.totalorder %v27, 2
  %vm48 = vcmp.lt.s32.totalorder %v27, 3
  %vm49 = vcmp.lt.s32.totalorder %v27, 4
  %v50 = vsel %vm46, %v30, %v33
  %v51 = vsel %vm49, %v39, 2102212464
  %v52 = vsel %vm48, %v36, %v51
  %v53 = vsel %vm47, %v50, %v52
  %v54 = vsel %vm46, %v33, %v36
  %v55 = vsel %vm49, %v42, 920167782
  %v56 = vsel %vm48, %v39, %v55
  %v57 = vsel %vm47, %v54, %v56
  %v58 = vsel %vm46, %v36, %v39
  %v59 = vsel %vm49, %v45, 1326507024
  %v60 = vsel %vm48, %v42, %v59
  %v61 = vsel %vm47, %v58, %v60
  %v62 = vshll.u32 %v22, 8
  %v63 = vmul.u32.u64.compose %v62, %v61
  %v64 = vextract.low.u32 %v63
  %v65 = vextract.high.u32 %v63
  %v66 = vmul.u32.u64.compose %v62, %v57
  %v67 = vextract.low.u32 %v66
  %v68 = vextract.high.u32 %v66
  %v69 = vmul.u32 %v62, %v53
  %v70 = vadd.s32 %v65, %v67
  %vm71 = vc.u32 %v65, %v67
  %v72 = vadd.s32 %v68, 1
  %v73 = vsel %vm71, %v72, %v68
  %v74 = vadd.s32 %v69, %v73
  %v75 = vadd.s32 %v74, 536870912
  %v76 = vshrl.u32 %v75, 30
  %v77 = vshll.u32 %v76, 30
  %v78 = vsub.s32 %v74, %v77
  %vm79 = vcmp.lt.s32.totalorder %v78, 0
  %v80 = vsub.s32 0, %v78
  %v81 = vsel %vm79, %v80, %v78
  %v82 = vclz %v81
  %v83 = vsub.s32 %v82, 2
  %vm84 = vcmp.gt.s32.totalorder 0, %v83
  %v85 = vsel %vm84, 0, %v83
  %v86 = vsub.s32 32, %v85
  %v87 = vshll.u32 %v78, %v85
  %v88 = vshrl.u32 %v70, %v86
  %v89 = vor.u32 %v87, %v88
  %v90 = vsub.s32 4294967266, %v85
  %v91 = vadd.s32 %v90, 127
  %v92 = vshll.u32 %v91, 23
  %v93 = vor.u32 4788187, %v92
  %v94 = vand.u32 2147483647, %v93
  %v96 = vcvt.s32.f32 %v89
  %v97 = vmul.f32 %v96, %v94
  %v98 = vxor.u32 %v97, 2147483648
  %v99 = vsel %vm16, %v98, %v97
  %v100 = vsub.s32 4, %v76
  %v101 = vsel %vm16, %v100, %v76
  %v102 = vsel %vm15, %v12, %v99
  %v103 = vsel %vm15, 0, %v101
  %v104 = vcosq.f32.pop %v102
  %v105 = vsinq.f32.pop %v102
  %vm106 = vweird.f32 %v12
  %v107 = vadd.s32 %v103, 3
  %v108 = vand.u32 %v107, 3
  %vm109 = vcmp.lt.s32.totalorder %v108, 2
  %vm110 = vcmp.eq.s32.totalorder %v108, 0
  %v111 = vxor.u32 %v105, 2147483648
  %v112 = vsel %vm110, %v104, %v111
  %vm113 = vcmp.eq.s32.totalorder %v108, 2
  %v114 = vxor.u32 %v104, 2147483648
  %v115 = vsel %vm113, %v114, %v105
  %v116 = vsel %vm109, %v112, %v115
  %v117 = vsel %vm106, nan, %v116
  %v118 = vand.u32 2147483647, %v13
  %vm119 = vcmp.le.f32.partialorder %v118, 0.7853982
  %vm120 = vcmp.lt.s32.totalorder %v13, 0
  %v121 = vand.u32 %v13, 2139095040
  %v122 = vshrl.u32 %v121, 23
  %v123 = vsub.s32 %v122, 127
  %v124 = vand.u32 2147483647, %v13
  %v125 = vand.u32 %v124, 8388607
  %v126 = vor.u32 %v125, 8388608
  %v127 = vsub.s32 0, %v126
  %v128 = vadd.s32 %v123, 1
  %vm129 = vcmp.gt.s32.totalorder %v128, 0
  %v130 = vsel %vm129, %v128, 0
  %v131 = vshrl.u32 %v130, 5
  %v132 = vand.u32 %v130, 31
  %v133 = vsub.s32 32, %v132
  %v134 = vshrl.u32 683565275, %v133
  %v135 = vshll.u32 683565275, %v132
  %v136 = vshrl.u32 2475754826, %v133
  %v137 = vor.u32 %v135, %v136
  %v138 = vshll.u32 2475754826, %v132
  %v139 = vshrl.u32 2131351028, %v133
  %v140 = vor.u32 %v138, %v139
  %v141 = vshll.u32 2131351028, %v132
  %v142 = vshrl.u32 2102212464, %v133
  %v143 = vor.u32 %v141, %v142
  %v144 = vshll.u32 2102212464, %v132
  %v145 = vshrl.u32 920167782, %v133
  %v146 = vor.u32 %v144, %v145
  %v147 = vshll.u32 920167782, %v132
  %v148 = vshrl.u32 1326507024, %v133
  %v149 = vor.u32 %v147, %v148
  %vm150 = vcmp.lt.s32.totalorder %v131, 1
  %vm151 = vcmp.lt.s32.totalorder %v131, 2
  %vm152 = vcmp.lt.s32.totalorder %v131, 3
  %vm153 = vcmp.lt.s32.totalorder %v131, 4
  %v154 = vsel %vm150, %v134, %v137
  %v155 = vsel %vm153, %v143, 2102212464
  %v156 = vsel %vm152, %v140, %v155
  %v157 = vsel %vm151, %v154, %v156
  %v158 = vsel %vm150, %v137, %v140
  %v159 = vsel %vm153, %v146, 920167782
  %v160 = vsel %vm152, %v143, %v159
  %v161 = vsel %vm151, %v158, %v160
  %v162 = vsel %vm150, %v140, %v143
  %v163 = vsel %vm153, %v149, 1326507024
  %v164 = vsel %vm152, %v146, %v163
  %v165 = vsel %vm151, %v162, %v164
  %v166 = vshll.u32 %v126, 8
  %v167 = vmul.u32.u64.compose %v166, %v165
  %v168 = vextract.low.u32 %v167
  %v169 = vextract.high.u32 %v167
  %v170 = vmul.u32.u64.compose %v166, %v161
  %v171 = vextract.low.u32 %v170
  %v172 = vextract.high.u32 %v170
  %v173 = vmul.u32 %v166, %v157
  %v174 = vadd.s32 %v169, %v171
  %vm175 = vc.u32 %v169, %v171
  %v176 = vadd.s32 %v172, 1
  %v177 = vsel %vm175, %v176, %v172
  %v178 = vadd.s32 %v173, %v177
  %v179 = vadd.s32 %v178, 536870912
  %v180 = vshrl.u32 %v179, 30
  %v181 = vshll.u32 %v180, 30
  %v182 = vsub.s32 %v178, %v181
  %vm183 = vcmp.lt.s32.totalorder %v182, 0
  %v184 = vsub.s32 0, %v182
  %v185 = vsel %vm183, %v184, %v182
  %v186 = vclz %v185
  %v187 = vsub.s32 %v186, 2
  %vm188 = vcmp.gt.s32.totalorder 0, %v187
  %v189 = vsel %vm188, 0, %v187
  %v190 = vsub.s32 32, %v189
  %v191 = vshll.u32 %v182, %v189
  %v192 = vshrl.u32 %v174, %v190
  %v193 = vor.u32 %v191, %v192
  %v194 = vsub.s32 4294967266, %v189
  %v195 = vadd.s32 %v194, 127
  %v196 = vshll.u32 %v195, 23
  %v197 = vor.u32 4788187, %v196
  %v198 = vand.u32 2147483647, %v197
  %v200 = vcvt.s32.f32 %v193
  %v201 = vmul.f32 %v200, %v198
  %v202 = vxor.u32 %v201, 2147483648
  %v203 = vsel %vm120, %v202, %v201
  %v204 = vsub.s32 4, %v180
  %v205 = vsel %vm120, %v204, %v180
  %v206 = vsel %vm119, %v13, %v203
  %v207 = vsel %vm119, 0, %v205
  %v208 = vcosq.f32.pop %v206
  %v209 = vsinq.f32.pop %v206
  %vm210 = vweird.f32 %v13
  %v211 = vadd.s32 %v207, 3
  %v212 = vand.u32 %v211, 3
  %vm213 = vcmp.lt.s32.totalorder %v212, 2
  %vm214 = vcmp.eq.s32.totalorder %v212, 0
  %v215 = vxor.u32 %v209, 2147483648
  %v216 = vsel %vm214, %v208, %v215
  %vm217 = vcmp.eq.s32.totalorder %v212, 2
  %v218 = vxor.u32 %v208, 2147483648
  %v219 = vsel %vm217, %v218, %v209
  %v220 = vsel %vm213, %v216, %v219
  %v221 = vsel %vm210, nan, %v220
  %v222 = vand.u32 2147483647, %v12
  %vm223 = vcmp.le.f32.partialorder %v222, 0.7853982
  %vm224 = vcmp.lt.s32.totalorder %v12, 0
  %v225 = vand.u32 %v12, 2139095040
  %v226 = vshrl.u32 %v225, 23
  %v227 = vsub.s32 %v226, 127
  %v228 = vand.u32 2147483647, %v12
  %v229 = vand.u32 %v228, 8388607
  %v230 = vor.u32 %v229, 8388608
  %v231 = vsub.s32 0, %v230
  %v232 = vadd.s32 %v227, 1
  %vm233 = vcmp.gt.s32.totalorder %v232, 0
  %v234 = vsel %vm233, %v232, 0
  %v235 = vshrl.u32 %v234, 5
  %v236 = vand.u32 %v234, 31
  %v237 = vsub.s32 32, %v236
  %v238 = vshrl.u32 683565275, %v237
  %v239 = vshll.u32 683565275, %v236
  %v240 = vshrl.u32 2475754826, %v237
  %v241 = vor.u32 %v239, %v240
  %v242 = vshll.u32 2475754826, %v236
  %v243 = vshrl.u32 2131351028, %v237
  %v244 = vor.u32 %v242, %v243
  %v245 = vshll.u32 2131351028, %v236
  %v246 = vshrl.u32 2102212464, %v237
  %v247 = vor.u32 %v245, %v246
  %v248 = vshll.u32 2102212464, %v236
  %v249 = vshrl.u32 920167782, %v237
  %v250 = vor.u32 %v248, %v249
  %v251 = vshll.u32 920167782, %v236
  %v252 = vshrl.u32 1326507024, %v237
  %v253 = vor.u32 %v251, %v252
  %vm254 = vcmp.lt.s32.totalorder %v235, 1
  %vm255 = vcmp.lt.s32.totalorder %v235, 2
  %vm256 = vcmp.lt.s32.totalorder %v235, 3
  %vm257 = vcmp.lt.s32.totalorder %v235, 4
  %v258 = vsel %vm254, %v238, %v241
  %v259 = vsel %vm257, %v247, 2102212464
  %v260 = vsel %vm256, %v244, %v259
  %v261 = vsel %vm255, %v258, %v260
  %v262 = vsel %vm254, %v241, %v244
  %v263 = vsel %vm257, %v250, 920167782
  %v264 = vsel %vm256, %v247, %v263
  %v265 = vsel %vm255, %v262, %v264
  %v266 = vsel %vm254, %v244, %v247
  %v267 = vsel %vm257, %v253, 1326507024
  %v268 = vsel %vm256, %v250, %v267
  %v269 = vsel %vm255, %v266, %v268
  %v270 = vshll.u32 %v230, 8
  %v271 = vmul.u32.u64.compose %v270, %v269
  %v272 = vextract.low.u32 %v271
  %v273 = vextract.high.u32 %v271
  %v274 = vmul.u32.u64.compose %v270, %v265
  %v275 = vextract.low.u32 %v274
  %v276 = vextract.high.u32 %v274
  %v277 = vmul.u32 %v270, %v261
  %v278 = vadd.s32 %v273, %v275
  %vm279 = vc.u32 %v273, %v275
  %v280 = vadd.s32 %v276, 1
  %v281 = vsel %vm279, %v280, %v276
  %v282 = vadd.s32 %v277, %v281
  %v283 = vadd.s32 %v282, 536870912
  %v284 = vshrl.u32 %v283, 30
  %v285 = vshll.u32 %v284, 30
  %v286 = vsub.s32 %v282, %v285
  %vm287 = vcmp.lt.s32.totalorder %v286, 0
  %v288 = vsub.s32 0, %v286
  %v289 = vsel %vm287, %v288, %v286
  %v290 = vclz %v289
  %v291 = vsub.s32 %v290, 2
  %vm292 = vcmp.gt.s32.totalorder 0, %v291
  %v293 = vsel %vm292, 0, %v291
  %v294 = vsub.s32 32, %v293
  %v295 = vshll.u32 %v286, %v293
  %v296 = vshrl.u32 %v278, %v294
  %v297 = vor.u32 %v295, %v296
  %v298 = vsub.s32 4294967266, %v293
  %v299 = vadd.s32 %v298, 127
  %v300 = vshll.u32 %v299, 23
  %v301 = vor.u32 4788187, %v300
  %v302 = vand.u32 2147483647, %v301
  %v304 = vcvt.s32.f32 %v297
  %v305 = vmul.f32 %v304, %v302
  %v306 = vxor.u32 %v305, 2147483648
  %v307 = vsel %vm224, %v306, %v305
  %v308 = vsub.s32 4, %v284
  %v309 = vsel %vm224, %v308, %v284
  %v310 = vsel %vm223, %v12, %v307
  %v311 = vsel %vm223, 0, %v309
  %v312 = vcosq.f32.pop %v310
  %v313 = vsinq.f32.pop %v310
  %vm314 = vweird.f32 %v12
  %v315 = vand.u32 %v311, 3
  %vm316 = vcmp.lt.s32.totalorder %v315, 2
  %vm317 = vcmp.eq.s32.totalorder %v315, 0
  %v318 = vxor.u32 %v313, 2147483648
  %v319 = vsel %vm317, %v312, %v318
  %vm320 = vcmp.eq.s32.totalorder %v315, 2
  %v321 = vxor.u32 %v312, 2147483648
  %v322 = vsel %vm320, %v321, %v313
  %v323 = vsel %vm316, %v319, %v322
  %v324 = vsel %vm314, nan, %v323
  %v325 = vand.u32 2147483647, %v13
  %vm326 = vcmp.le.f32.partialorder %v325, 0.7853982
  %vm327 = vcmp.lt.s32.totalorder %v13, 0
  %v328 = vand.u32 %v13, 2139095040
  %v329 = vshrl.u32 %v328, 23
  %v330 = vsub.s32 %v329, 127
  %v331 = vand.u32 2147483647, %v13
  %v332 = vand.u32 %v331, 8388607
  %v333 = vor.u32 %v332, 8388608
  %v334 = vsub.s32 0, %v333
  %v335 = vadd.s32 %v330, 1
  %vm336 = vcmp.gt.s32.totalorder %v335, 0
  %v337 = vsel %vm336, %v335, 0
  %v338 = vshrl.u32 %v337, 5
  %v339 = vand.u32 %v337, 31
  %v340 = vsub.s32 32, %v339
  %v341 = vshrl.u32 683565275, %v340
  %v342 = vshll.u32 683565275, %v339
  %v343 = vshrl.u32 2475754826, %v340
  %v344 = vor.u32 %v342, %v343
  %v345 = vshll.u32 2475754826, %v339
  %v346 = vshrl.u32 2131351028, %v340
  %v347 = vor.u32 %v345, %v346
  %v348 = vshll.u32 2131351028, %v339
  %v349 = vshrl.u32 2102212464, %v340
  %v350 = vor.u32 %v348, %v349
  %v351 = vshll.u32 2102212464, %v339
  %v352 = vshrl.u32 920167782, %v340
  %v353 = vor.u32 %v351, %v352
  %v354 = vshll.u32 920167782, %v339
  %v355 = vshrl.u32 1326507024, %v340
  %v356 = vor.u32 %v354, %v355
  %vm357 = vcmp.lt.s32.totalorder %v338, 1
  %vm358 = vcmp.lt.s32.totalorder %v338, 2
  %vm359 = vcmp.lt.s32.totalorder %v338, 3
  %vm360 = vcmp.lt.s32.totalorder %v338, 4
  %v361 = vsel %vm357, %v341, %v344
  %v362 = vsel %vm360, %v350, 2102212464
  %v363 = vsel %vm359, %v347, %v362
  %v364 = vsel %vm358, %v361, %v363
  %v365 = vsel %vm357, %v344, %v347
  %v366 = vsel %vm360, %v353, 920167782
  %v367 = vsel %vm359, %v350, %v366
  %v368 = vsel %vm358, %v365, %v367
  %v369 = vsel %vm357, %v347, %v350
  %v370 = vsel %vm360, %v356, 1326507024
  %v371 = vsel %vm359, %v353, %v370
  %v372 = vsel %vm358, %v369, %v371
  %v373 = vshll.u32 %v333, 8
  %v374 = vmul.u32.u64.compose %v373, %v372
  %v375 = vextract.low.u32 %v374
  %v376 = vextract.high.u32 %v374
  %v377 = vmul.u32.u64.compose %v373, %v368
  %v378 = vextract.low.u32 %v377
  %v379 = vextract.high.u32 %v377
  %v380 = vmul.u32 %v373, %v364
  %v381 = vadd.s32 %v376, %v378
  %vm382 = vc.u32 %v376, %v378
  %v383 = vadd.s32 %v379, 1
  %v384 = vsel %vm382, %v383, %v379
  %v385 = vadd.s32 %v380, %v384
  %v386 = vadd.s32 %v385, 536870912
  %v387 = vshrl.u32 %v386, 30
  %v388 = vshll.u32 %v387, 30
  %v389 = vsub.s32 %v385, %v388
  %vm390 = vcmp.lt.s32.totalorder %v389, 0
  %v391 = vsub.s32 0, %v389
  %v392 = vsel %vm390, %v391, %v389
  %v393 = vclz %v392
  %v394 = vsub.s32 %v393, 2
  %vm395 = vcmp.gt.s32.totalorder 0, %v394
  %v396 = vsel %vm395, 0, %v394
  %v397 = vsub.s32 32, %v396
  %v398 = vshll.u32 %v389, %v396
  %v399 = vshrl.u32 %v381, %v397
  %v400 = vor.u32 %v398, %v399
  %v401 = vsub.s32 4294967266, %v396
  %v402 = vadd.s32 %v401, 127
  %v403 = vshll.u32 %v402, 23
  %v404 = vor.u32 4788187, %v403
  %v405 = vand.u32 2147483647, %v404
  %v407 = vcvt.s32.f32 %v400
  %v408 = vmul.f32 %v407, %v405
  %v409 = vxor.u32 %v408, 2147483648
  %v410 = vsel %vm327, %v409, %v408
  %v411 = vsub.s32 4, %v387
  %v412 = vsel %vm327, %v411, %v387
  %v413 = vsel %vm326, %v13, %v410
  %v414 = vsel %vm326, 0, %v412
  %v415 = vcosq.f32.pop %v413
  %v416 = vsinq.f32.pop %v413
  %vm417 = vweird.f32 %v13
  %v418 = vand.u32 %v414, 3
  %vm419 = vcmp.lt.s32.totalorder %v418, 2
  %vm420 = vcmp.eq.s32.totalorder %v418, 0
  %v421 = vxor.u32 %v416, 2147483648
  %v422 = vsel %vm420, %v415, %v421
  %vm423 = vcmp.eq.s32.totalorder %v418, 2
  %v424 = vxor.u32 %v415, 2147483648
  %v425 = vsel %vm423, %v424, %v416
  %v426 = vsel %vm419, %v422, %v425
  %v427 = vsel %vm417, nan, %v426
  %v428 = vmul.f32 %v117, 0.6
  %v429 = vsub.f32 %v8, %v428
  %v430 = vmul.f32 %v221, 0.6
  %v431 = vsub.f32 %v429, %v430
  %v432 = vmul.f32 %v324, 0.6
  %v433 = vmul.f32 %v427, 0.6
  %v434 = vadd.f32 %v432, %v433
  %v435 = vsub.f32 %v434, 1.2
  %v436 = vmul.f32 %v431, -0.6944444
  %v437 = vmul.f32 %v436, %v431
  %v438 = vmul.f32 %v431, -0.0
  %v439 = vmul.f32 %v438, %v435
  %v440 = vadd.f32 %v437, %v439
  %v441 = vmul.f32 %v435, -0.6944444
  %v442 = vmul.f32 %v441, %v435
  %v443 = vadd.f32 %v440, %v442
  %v444 = vmul.f32 %v10, -5e-05
  %v445 = vmul.f32 %v444, %v10
  %v446 = vadd.f32 %v443, %v445
  %v447 = vmul.f32 %v446, 1.442695
  %v448 = vpow.pop %v447
  %449 = vst [vmem:[%s1] sm:$0xff] %v448
  // Predicated region
  $region6: #{_cart_acrobot_reward_impl.1} parent=0 // pred_check
    _
  $region7: #{_cart_acrobot_reward_impl.1} parent=0 // pred_check_branch
    %451 = sbr.rel (0) target = $region9
  $region8: #{_cart_acrobot_reward_impl.1} parent=0 // pred_region
    _
  $region9: #{_cart_acrobot_reward_impl.1} parent=0 // pred_fallthru
    _
  // Predicated region
  $region10: #{_cart_acrobot_reward_impl.1} parent=0 // pred_check
    _
  $region11: #{_cart_acrobot_reward_impl.1} parent=0 // pred_check_branch
    %453 = sbr.rel (0) target = $region13
  $region12: #{_cart_acrobot_reward_impl.1} parent=0 // pred_region
    _
  $region13: #{_cart_acrobot_reward_impl.1} parent=0 // pred_fallthru
    _

</llo_original>
